<compile_context>
chip_gen: v6e
topology: v6e:2x2x1
jax: 0.10.0
libtpu: 0.0.40
codegen_flags: <defaults>
</compile_context>

<pallas_src>
import functools
import math

import jax
import jax.numpy as jnp
from jax.experimental import pallas as pl
from jax.experimental.pallas import tpu as pltpu

_ATT_SLOPE = 0.2     # GATConv's internal LeakyReLU on attention logits
_ACT_SLOPE = 0.01    # F.leaky_relu (default slope) between conv layers
_MASK_NEG = 1e30


def _leaky(x, slope):
    return jnp.where(x > 0, x, slope * x)


# ------------------------------------------------------------- fused GAT layer kernel

def _gat_layer_kernel(c_ref, x_all_ref, x_tile_ref, w_ref, wasT_ref, wad_ref, bias_ref,
                      e_ref, o_ref, *, heads, out_ch, post_relu):
    """One destination-row tile of GATConv: projection + masked softmax + message."""
    x_all = x_all_ref[...]                                        # [N, F] bf16 (sources)
    w = w_ref[...]                                                # [F, H*C] bf16
    xw = jnp.dot(x_all, w, preferred_element_type=jnp.float32)    # [N, H*C] f32
    xw_bf = xw.astype(jnp.bfloat16)

    # alpha projections folded through W:  (x @ W) @ a  ==  x @ (W @ a)
    a_dst = jnp.dot(x_tile_ref[...], wad_ref[...],
                    preferred_element_type=jnp.float32)           # [T, H]
    a_srcT = jnp.einsum("hf,nf->hn", wasT_ref[...], x_all,
                        preferred_element_type=jnp.float32)       # [H, N]

    e = e_ref[...].astype(jnp.float32)                            # [T, N]; -1 == no edge
    edge_ok = e >= 0.0                                            # every row has a self loop
    n_src = e.shape[1]
    ones_col = jnp.ones((n_src, 1), jnp.bfloat16)                 # MXU row-sum column

    outs = []
    for h in range(heads):
        lo = h * out_ch
        c_h = c_ref[h]                                            # SMEM scalar
        # logits[i, j] = a_dst(i) + a_src(j) + c_h * e(i, j)   (fused broadcast adds)
        s = a_dst[:, h:h + 1] + (a_srcT[h:h + 1, :] + c_h * e)
        s = _leaky(s, _ATT_SLOPE)
        s = jnp.where(edge_ok, s, -_MASK_NEG)                     # mask non-edges
        p = jnp.exp(s - jnp.max(s, axis=1, keepdims=True))        # unnormalized softmax
        p_bf = p.astype(jnp.bfloat16)
        msg = jnp.dot(p_bf, xw_bf[:, lo:lo + out_ch],
                      preferred_element_type=jnp.float32)         # [T, C] bf16 MXU, f32 acc
        row_sum = jnp.dot(p_bf, ones_col,
                          preferred_element_type=jnp.float32)     # [T, 1] on the MXU
        outs.append(msg * pl.reciprocal(row_sum, approx=True))
    out = outs[0] if heads == 1 else jnp.concatenate(outs, axis=1)  # [T, H*C]
    out = out + bias_ref[...]
    if post_relu:
        out = _leaky(out, _ACT_SLOPE)
    o_ref[...] = out.astype(o_ref.dtype)                          # single lane-dense store


# ------------------------------------------------------------- per-chip tiling helpers

def _vmem_budget_bytes():
    cap = 64 * 1024 * 1024                                        # conservative default
    try:
        cap = int(getattr(pltpu.get_tpu_info(), "vmem_capacity_bytes", cap))
    except Exception:
        pass
    # ~100 MiB on the 128 MiB generations (v5e/v6e), ~50 MiB on 64 MiB (v7x).
    return int(min(0.78 * cap, 100 * 1024 * 1024))


def _pick_tile(n, hc, vmem_budget, min_tile=8):
    """Largest destination-row tile that fits the VMEM budget, with >= 2 grid steps."""
    if n % min_tile != 0:
        return n                                                  # tiny/odd graph: 1 block
    cap = 512 if vmem_budget >= 80 * 1024 * 1024 else 256         # 128 MiB vs 64 MiB VMEM
    row_bytes = 2 * (n + hc) + 4 * n                              # e stream + out + f32 logits
    cap = min(cap, max(min_tile, (vmem_budget // 4) // max(row_bytes, 1)))
    if n >= 2 * min_tile:
        cap = min(cap, n // 2)                                    # keep both v7x TCs busy
    t = max(min_tile, (min(cap, n) // min_tile) * min_tile)
    while t > min_tile and n % t:
        t -= min_tile
    return t


# ------------------------------------------------------------- layer / pooling wrappers

def gat_layer(x, W, att_src, att_dst, w_edge, att_edge, bias, e_bf,
              *, heads, out_ch, post_relu):
    n, in_dim = x.shape
    hc = heads * out_ch

    # Fold the per-head attention vectors through W:  alpha = x @ (W @ blockdiag(a)).
    asrc_bd = jnp.zeros((hc, heads), jnp.float32)
    adst_bd = jnp.zeros((hc, heads), jnp.float32)
    for h in range(heads):
        asrc_bd = asrc_bd.at[h * out_ch:(h + 1) * out_ch, h].set(att_src[h])
        adst_bd = adst_bd.at[h * out_ch:(h + 1) * out_ch, h].set(att_dst[h])
    wa_srcT = (W @ asrc_bd).T.astype(jnp.bfloat16)                # [H, F]
    wa_dst = (W @ adst_bd).astype(jnp.bfloat16)                   # [F, H]
    # edge_dim=1: lin_edge + att_edge collapse to one scalar coefficient per head.
    c = jnp.sum(w_edge.reshape(heads, out_ch) * att_edge, axis=1).astype(jnp.float32)

    x_bf = x.astype(jnp.bfloat16)
    w_bf = W.astype(jnp.bfloat16)
    bias2 = bias.reshape(1, hc).astype(jnp.float32)

    budget = _vmem_budget_bytes()
    tile_n = _pick_tile(n, hc, budget)
    if n % tile_n:
        tile_n = n
    n_tiles = n // tile_n

    kernel = functools.partial(_gat_layer_kernel, heads=heads, out_ch=out_ch,
                               post_relu=post_relu)
    return pl.pallas_call(
        kernel,
        out_shape=jax.ShapeDtypeStruct((n, hc), jnp.bfloat16),
        grid=(n_tiles,),
        in_specs=[
            pl.BlockSpec(memory_space=pltpu.MemorySpace.SMEM),    # c: per-head edge coeff
            pl.BlockSpec((n, in_dim), lambda i: (0, 0)),          # x (all sources, resident)
            pl.BlockSpec((tile_n, in_dim), lambda i: (i, 0)),     # x (destination-row tile)
            pl.BlockSpec((in_dim, hc), lambda i: (0, 0)),         # W (bf16, resident)
            pl.BlockSpec((heads, in_dim), lambda i: (0, 0)),      # (W @ a_src)^T
            pl.BlockSpec((in_dim, heads), lambda i: (0, 0)),      # W @ a_dst
            pl.BlockSpec((1, hc), lambda i: (0, 0)),              # bias
            pl.BlockSpec((tile_n, n), lambda i: (i, 0)),          # dense edge values (-1 off-edge)
        ],
        out_specs=pl.BlockSpec((tile_n, hc), lambda i: (i, 0)),
        compiler_params=pltpu.CompilerParams(
            dimension_semantics=("parallel",),
            vmem_limit_bytes=budget),
    )(c, x_bf, x_bf, w_bf, wa_srcT, wa_dst, bias2, e_bf)


def _pool_kernel(p_ref, x_ref, o_ref):
    o_ref[...] = jnp.dot(p_ref[...], x_ref[...], preferred_element_type=jnp.float32)


def global_add_pool(x, batch_onehot):
    g = batch_onehot.shape[0]
    vmem = pl.BlockSpec(memory_space=pltpu.MemorySpace.VMEM)
    return pl.pallas_call(
        _pool_kernel,
        out_shape=jax.ShapeDtypeStruct((g, x.shape[1]), jnp.float32),
        in_specs=[vmem, vmem],
        out_specs=vmem,
    )(batch_onehot.astype(x.dtype), x)


# ------------------------------------------------------------- glue / driver

def build_dense_edges(edge_index, edge_attr, num_nodes):
    """forward()'s edge-weight transform + densification (done once, reused by all 4 convs).

    ew = attr / attr.max(); att = exp(-|ew - mean(ew)|); value = ew * att; then PyG
    GATConv add_self_loops(fill_value='mean') (per-destination mean).  Off-edge entries
    hold the sentinel -1 so the kernel recovers the adjacency as (e >= 0); all real edge
    values (and self-loop fills) are >= 0.
    """
    ew = edge_attr[:, 0]
    ew = ew / jnp.max(ew)
    att = jnp.exp(-jnp.abs(ew - jnp.mean(ew)))
    ea = (ew * att).astype(jnp.float32)
    src, dst = edge_index[0], edge_index[1]
    sum_in = jnp.zeros((num_nodes,), jnp.float32).at[dst].add(ea)
    cnt_in = jnp.zeros((num_nodes,), jnp.float32).at[dst].add(1.0)
    mean_in = jnp.where(cnt_in > 0, sum_in / jnp.maximum(cnt_in, 1.0), 0.0)
    e = jnp.full((num_nodes, num_nodes), -1.0, jnp.float32).at[dst, src].set(ea)
    diag = jnp.arange(num_nodes)
    e = e.at[diag, diag].set(mean_in)                 # self loops, fill_value='mean'
    return e.astype(jnp.bfloat16)


def init_gat_params(key, in_dim, out_ch, heads):
    ks = jax.random.split(key, 6)
    hc = heads * out_ch
    scale = 1.0 / math.sqrt(in_dim)
    W = jax.random.normal(ks[0], (in_dim, hc), jnp.float32) * scale
    att_src = jax.random.normal(ks[1], (heads, out_ch), jnp.float32) * 0.1
    att_dst = jax.random.normal(ks[2], (heads, out_ch), jnp.float32) * 0.1
    w_edge = jax.random.normal(ks[3], (hc,), jnp.float32) * 0.5
    att_edge = jax.random.normal(ks[4], (heads, out_ch), jnp.float32) * 0.1
    bias = jax.random.normal(ks[5], (hc,), jnp.float32) * 0.01
    return (W, att_src, att_dst, w_edge, att_edge, bias)


def graph_embedding_forward(params, x, e_bf, batch_onehot, hidden_dim, out_dim, heads):
    h = gat_layer(x, *params[0], e_bf, heads=heads, out_ch=hidden_dim, post_relu=True)
    h = gat_layer(h, *params[1], e_bf, heads=heads, out_ch=hidden_dim, post_relu=True)
    h = gat_layer(h, *params[2], e_bf, heads=heads, out_ch=hidden_dim, post_relu=True)
    h = gat_layer(h, *params[3], e_bf, heads=1, out_ch=out_dim, post_relu=False)
    return global_add_pool(h, batch_onehot)   # concat=False with 1 head == identity mean


if __name__ == "__main__":
    key = jax.random.PRNGKey(0)
    kx, ke, k1, k2, k3, k4 = jax.random.split(key, 6)

    num_nodes, in_dim, hidden_dim, out_dim, heads = 16, 8, 32, 16, 4
    num_graphs = 2
    per = num_nodes // num_graphs

    x = jax.random.normal(kx, (num_nodes, in_dim), jnp.float32)

    # deterministic ring-ish edges within each graph: no self loops, no duplicates
    src, dst = [], []
    for g in range(num_graphs):
        base = g * per
        for i in range(per):
            for off in (1, 2, 3):
                src.append(base + i)
                dst.append(base + (i + off) % per)
    edge_index = jnp.array([src, dst], dtype=jnp.int32)            # [2, E]
    edge_attr = jax.random.uniform(ke, (edge_index.shape[1], 1), jnp.float32, 0.1, 2.0)

    batch = jnp.repeat(jnp.arange(num_graphs), per)
    batch_onehot = jax.nn.one_hot(batch, num_graphs, dtype=jnp.float32).T   # [G, N]

    e_bf = build_dense_edges(edge_index, edge_attr, num_nodes)

    params = [
        init_gat_params(k1, in_dim, hidden_dim, heads),
        init_gat_params(k2, hidden_dim * heads, hidden_dim, heads),
        init_gat_params(k3, hidden_dim * heads, hidden_dim, heads),
        init_gat_params(k4, hidden_dim * heads, out_dim, 1),
    ]

    out = graph_embedding_forward(params, x, e_bf, batch_onehot,
                                  hidden_dim, out_dim, heads)
    jax.block_until_ready(out)
    assert out.shape == (num_graphs, out_dim) and out.dtype == jnp.float32
    print("KERNEL_OK")
</pallas_src>

<mosaic_0001>
module attributes {stable_mosaic.version = 11 : i64} {
  func.func @_gat_layer_kernel(%arg0: i32, %arg1: memref<4xf32, #tpu.memory_space<smem>>, %arg2: memref<16x8xbf16, #tpu.memory_space<vmem>>, %arg3: memref<8x8xbf16, #tpu.memory_space<vmem>>, %arg4: memref<8x128xbf16, #tpu.memory_space<vmem>>, %arg5: memref<4x8xbf16, #tpu.memory_space<vmem>>, %arg6: memref<8x4xbf16, #tpu.memory_space<vmem>>, %arg7: memref<1x128xf32, #tpu.memory_space<vmem>>, %arg8: memref<8x16xbf16, #tpu.memory_space<vmem>>, %arg9: memref<8x128xbf16, #tpu.memory_space<vmem>>) attributes {dimension_semantics = [#tpu.dimension_semantics<parallel>], iteration_bounds = array<i64: 2>, scalar_prefetch = 0 : i64, scratch_operands = 0 : i64, tpu.core_type = #tpu.core_type<tc>, window_params = [{transform_indices = @transform_0, window_bounds = array<i64: 4>}, {pipeline_mode = #tpu.pipeline_mode<synchronous>, transform_indices = @transform_1, window_bounds = array<i64: 16, 8>}, {transform_indices = @transform_2, window_bounds = array<i64: 8, 8>}, {pipeline_mode = #tpu.pipeline_mode<synchronous>, transform_indices = @transform_3, window_bounds = array<i64: 8, 128>}, {pipeline_mode = #tpu.pipeline_mode<synchronous>, transform_indices = @transform_4, window_bounds = array<i64: 4, 8>}, {pipeline_mode = #tpu.pipeline_mode<synchronous>, transform_indices = @transform_5, window_bounds = array<i64: 8, 4>}, {pipeline_mode = #tpu.pipeline_mode<synchronous>, transform_indices = @transform_6, window_bounds = array<i64: 1, 128>}, {transform_indices = @transform_7, window_bounds = array<i64: 8, 16>}, {transform_indices = @transform_8, window_bounds = array<i64: 8, 128>}]} {
    %c0 = arith.constant 0 : index
    %c0_0 = arith.constant 0 : index
    %0 = vector.load %arg2[%c0, %c0_0] : memref<16x8xbf16, #tpu.memory_space<vmem>>, vector<16x8xbf16>
    %c0_1 = arith.constant 0 : index
    %c0_2 = arith.constant 0 : index
    %1 = vector.load %arg4[%c0_1, %c0_2] : memref<8x128xbf16, #tpu.memory_space<vmem>>, vector<8x128xbf16>
    %cst = arith.constant dense<0.000000e+00> : vector<16x128xf32>
    %2 = tpu.matmul %0, %1, %cst {dimension_numbers = #tpu.dot_dimension_numbers<[1], [0], [0], [1], [0, 0, 1, 1], [], []>} : vector<16x8xbf16>, vector<8x128xbf16>, vector<16x128xf32> -> vector<16x128xf32>
    %3 = arith.truncf %2 : vector<16x128xf32> to vector<16x128xbf16>
    %c0_3 = arith.constant 0 : index
    %c0_4 = arith.constant 0 : index
    %4 = vector.load %arg3[%c0_3, %c0_4] : memref<8x8xbf16, #tpu.memory_space<vmem>>, vector<8x8xbf16>
    %c0_5 = arith.constant 0 : index
    %c0_6 = arith.constant 0 : index
    %5 = vector.load %arg6[%c0_5, %c0_6] : memref<8x4xbf16, #tpu.memory_space<vmem>>, vector<8x4xbf16>
    %cst_7 = arith.constant dense<0.000000e+00> : vector<8x4xf32>
    %6 = tpu.matmul %4, %5, %cst_7 {dimension_numbers = #tpu.dot_dimension_numbers<[1], [0], [0], [1], [0, 0, 1, 1], [], []>} : vector<8x8xbf16>, vector<8x4xbf16>, vector<8x4xf32> -> vector<8x4xf32>
    %c0_8 = arith.constant 0 : index
    %c0_9 = arith.constant 0 : index
    %7 = vector.load %arg5[%c0_8, %c0_9] : memref<4x8xbf16, #tpu.memory_space<vmem>>, vector<4x8xbf16>
    "tpu.trace_start"() <{level = 10 : i32, message = "hf,nf->hn"}> : () -> ()
    %cst_10 = arith.constant dense<0.000000e+00> : vector<4x16xf32>
    %8 = tpu.matmul %7, %0, %cst_10 {dimension_numbers = #tpu.dot_dimension_numbers<[1], [1], [0], [0], [0, 0, 1, 0], [], []>} : vector<4x8xbf16>, vector<16x8xbf16>, vector<4x16xf32> -> vector<4x16xf32>
    "tpu.trace_stop"() : () -> ()
    %c0_11 = arith.constant 0 : index
    %c0_12 = arith.constant 0 : index
    %9 = vector.load %arg8[%c0_11, %c0_12] : memref<8x16xbf16, #tpu.memory_space<vmem>>, vector<8x16xbf16>
    %10 = arith.extf %9 : vector<8x16xbf16> to vector<8x16xf32>
    %cst_13 = arith.constant 0.000000e+00 : f32
    %11 = vector.broadcast %cst_13 : f32 to vector<8x16xf32>
    %12 = arith.cmpf oge, %10, %11 : vector<8x16xf32>
    %cst_14 = arith.constant 1.000000e+00 : bf16
    %13 = vector.broadcast %cst_14 : bf16 to vector<16x1xbf16>
    %c0_15 = arith.constant 0 : index
    %14 = memref.load %arg1[%c0_15] : memref<4xf32, #tpu.memory_space<smem>>
    %15 = vector.extract_strided_slice %6 {offsets = [0, 0], sizes = [8, 1], strides = [1, 1]} : vector<8x4xf32> to vector<8x1xf32>
    %16 = vector.extract_strided_slice %8 {offsets = [0, 0], sizes = [1, 16], strides = [1, 1]} : vector<4x16xf32> to vector<1x16xf32>
    %17 = vector.broadcast %14 : f32 to vector<8x16xf32>
    %18 = arith.mulf %17, %10 : vector<8x16xf32>
    %19 = vector.broadcast %16 : vector<1x16xf32> to vector<8x16xf32>
    %20 = arith.addf %19, %18 : vector<8x16xf32>
    %21 = vector.broadcast %15 : vector<8x1xf32> to vector<8x16xf32>
    %22 = arith.addf %21, %20 : vector<8x16xf32>
    %cst_16 = arith.constant 0.000000e+00 : f32
    %23 = vector.broadcast %cst_16 : f32 to vector<8x16xf32>
    %24 = arith.cmpf ogt, %22, %23 : vector<8x16xf32>
    %cst_17 = arith.constant 2.000000e-01 : f32
    %25 = vector.broadcast %cst_17 : f32 to vector<8x16xf32>
    %26 = arith.mulf %25, %22 : vector<8x16xf32>
    %27 = arith.select %24, %22, %26 : vector<8x16xi1>, vector<8x16xf32>
    %cst_18 = arith.constant -1.000000e+30 : f32
    %28 = vector.broadcast %cst_18 : f32 to vector<8x16xf32>
    %29 = arith.select %12, %27, %28 : vector<8x16xi1>, vector<8x16xf32>
    %cst_19 = arith.constant dense<0xFF800000> : vector<8xf32>
    %30 = vector.multi_reduction <maximumf>, %29, %cst_19 [1] : vector<8x16xf32> to vector<8xf32>
    %31 = vector.shape_cast %30 : vector<8xf32> to vector<8x1xf32>
    %32 = vector.broadcast %31 : vector<8x1xf32> to vector<8x16xf32>
    %33 = arith.subf %29, %32 : vector<8x16xf32>
    %34 = math.exp %33 : vector<8x16xf32>
    %35 = arith.truncf %34 : vector<8x16xf32> to vector<8x16xbf16>
    %36 = vector.extract_strided_slice %3 {offsets = [0, 0], sizes = [16, 32], strides = [1, 1]} : vector<16x128xbf16> to vector<16x32xbf16>
    %cst_20 = arith.constant dense<0.000000e+00> : vector<8x32xf32>
    %37 = tpu.matmul %35, %36, %cst_20 {dimension_numbers = #tpu.dot_dimension_numbers<[1], [0], [0], [1], [0, 0, 1, 1], [], []>} : vector<8x16xbf16>, vector<16x32xbf16>, vector<8x32xf32> -> vector<8x32xf32>
    %cst_21 = arith.constant dense<0.000000e+00> : vector<8x1xf32>
    %38 = tpu.matmul %35, %13, %cst_21 {dimension_numbers = #tpu.dot_dimension_numbers<[1], [0], [0], [1], [0, 0, 1, 1], [], []>} : vector<8x16xbf16>, vector<16x1xbf16>, vector<8x1xf32> -> vector<8x1xf32>
    %39 = tpu.reciprocal %38 {approx = true} : vector<8x1xf32> -> vector<8x1xf32>
    %40 = vector.broadcast %39 : vector<8x1xf32> to vector<8x32xf32>
    %41 = arith.mulf %37, %40 : vector<8x32xf32>
    %c1 = arith.constant 1 : index
    %42 = memref.load %arg1[%c1] : memref<4xf32, #tpu.memory_space<smem>>
    %43 = vector.extract_strided_slice %6 {offsets = [0, 1], sizes = [8, 1], strides = [1, 1]} : vector<8x4xf32> to vector<8x1xf32>
    %44 = vector.extract_strided_slice %8 {offsets = [1, 0], sizes = [1, 16], strides = [1, 1]} : vector<4x16xf32> to vector<1x16xf32>
    %45 = vector.broadcast %42 : f32 to vector<8x16xf32>
    %46 = arith.mulf %45, %10 : vector<8x16xf32>
    %47 = vector.broadcast %44 : vector<1x16xf32> to vector<8x16xf32>
    %48 = arith.addf %47, %46 : vector<8x16xf32>
    %49 = vector.broadcast %43 : vector<8x1xf32> to vector<8x16xf32>
    %50 = arith.addf %49, %48 : vector<8x16xf32>
    %cst_22 = arith.constant 0.000000e+00 : f32
    %51 = vector.broadcast %cst_22 : f32 to vector<8x16xf32>
    %52 = arith.cmpf ogt, %50, %51 : vector<8x16xf32>
    %cst_23 = arith.constant 2.000000e-01 : f32
    %53 = vector.broadcast %cst_23 : f32 to vector<8x16xf32>
    %54 = arith.mulf %53, %50 : vector<8x16xf32>
    %55 = arith.select %52, %50, %54 : vector<8x16xi1>, vector<8x16xf32>
    %cst_24 = arith.constant -1.000000e+30 : f32
    %56 = vector.broadcast %cst_24 : f32 to vector<8x16xf32>
    %57 = arith.select %12, %55, %56 : vector<8x16xi1>, vector<8x16xf32>
    %cst_25 = arith.constant dense<0xFF800000> : vector<8xf32>
    %58 = vector.multi_reduction <maximumf>, %57, %cst_25 [1] : vector<8x16xf32> to vector<8xf32>
    %59 = vector.shape_cast %58 : vector<8xf32> to vector<8x1xf32>
    %60 = vector.broadcast %59 : vector<8x1xf32> to vector<8x16xf32>
    %61 = arith.subf %57, %60 : vector<8x16xf32>
    %62 = math.exp %61 : vector<8x16xf32>
    %63 = arith.truncf %62 : vector<8x16xf32> to vector<8x16xbf16>
    %64 = vector.extract_strided_slice %3 {offsets = [0, 32], sizes = [16, 32], strides = [1, 1]} : vector<16x128xbf16> to vector<16x32xbf16>
    %cst_26 = arith.constant dense<0.000000e+00> : vector<8x32xf32>
    %65 = tpu.matmul %63, %64, %cst_26 {dimension_numbers = #tpu.dot_dimension_numbers<[1], [0], [0], [1], [0, 0, 1, 1], [], []>} : vector<8x16xbf16>, vector<16x32xbf16>, vector<8x32xf32> -> vector<8x32xf32>
    %cst_27 = arith.constant dense<0.000000e+00> : vector<8x1xf32>
    %66 = tpu.matmul %63, %13, %cst_27 {dimension_numbers = #tpu.dot_dimension_numbers<[1], [0], [0], [1], [0, 0, 1, 1], [], []>} : vector<8x16xbf16>, vector<16x1xbf16>, vector<8x1xf32> -> vector<8x1xf32>
    %67 = tpu.reciprocal %66 {approx = true} : vector<8x1xf32> -> vector<8x1xf32>
    %68 = vector.broadcast %67 : vector<8x1xf32> to vector<8x32xf32>
    %69 = arith.mulf %65, %68 : vector<8x32xf32>
    %c2 = arith.constant 2 : index
    %70 = memref.load %arg1[%c2] : memref<4xf32, #tpu.memory_space<smem>>
    %71 = vector.extract_strided_slice %6 {offsets = [0, 2], sizes = [8, 1], strides = [1, 1]} : vector<8x4xf32> to vector<8x1xf32>
    %72 = vector.extract_strided_slice %8 {offsets = [2, 0], sizes = [1, 16], strides = [1, 1]} : vector<4x16xf32> to vector<1x16xf32>
    %73 = vector.broadcast %70 : f32 to vector<8x16xf32>
    %74 = arith.mulf %73, %10 : vector<8x16xf32>
    %75 = vector.broadcast %72 : vector<1x16xf32> to vector<8x16xf32>
    %76 = arith.addf %75, %74 : vector<8x16xf32>
    %77 = vector.broadcast %71 : vector<8x1xf32> to vector<8x16xf32>
    %78 = arith.addf %77, %76 : vector<8x16xf32>
    %cst_28 = arith.constant 0.000000e+00 : f32
    %79 = vector.broadcast %cst_28 : f32 to vector<8x16xf32>
    %80 = arith.cmpf ogt, %78, %79 : vector<8x16xf32>
    %cst_29 = arith.constant 2.000000e-01 : f32
    %81 = vector.broadcast %cst_29 : f32 to vector<8x16xf32>
    %82 = arith.mulf %81, %78 : vector<8x16xf32>
    %83 = arith.select %80, %78, %82 : vector<8x16xi1>, vector<8x16xf32>
    %cst_30 = arith.constant -1.000000e+30 : f32
    %84 = vector.broadcast %cst_30 : f32 to vector<8x16xf32>
    %85 = arith.select %12, %83, %84 : vector<8x16xi1>, vector<8x16xf32>
    %cst_31 = arith.constant dense<0xFF800000> : vector<8xf32>
    %86 = vector.multi_reduction <maximumf>, %85, %cst_31 [1] : vector<8x16xf32> to vector<8xf32>
    %87 = vector.shape_cast %86 : vector<8xf32> to vector<8x1xf32>
    %88 = vector.broadcast %87 : vector<8x1xf32> to vector<8x16xf32>
    %89 = arith.subf %85, %88 : vector<8x16xf32>
    %90 = math.exp %89 : vector<8x16xf32>
    %91 = arith.truncf %90 : vector<8x16xf32> to vector<8x16xbf16>
    %92 = vector.extract_strided_slice %3 {offsets = [0, 64], sizes = [16, 32], strides = [1, 1]} : vector<16x128xbf16> to vector<16x32xbf16>
    %cst_32 = arith.constant dense<0.000000e+00> : vector<8x32xf32>
    %93 = tpu.matmul %91, %92, %cst_32 {dimension_numbers = #tpu.dot_dimension_numbers<[1], [0], [0], [1], [0, 0, 1, 1], [], []>} : vector<8x16xbf16>, vector<16x32xbf16>, vector<8x32xf32> -> vector<8x32xf32>
    %cst_33 = arith.constant dense<0.000000e+00> : vector<8x1xf32>
    %94 = tpu.matmul %91, %13, %cst_33 {dimension_numbers = #tpu.dot_dimension_numbers<[1], [0], [0], [1], [0, 0, 1, 1], [], []>} : vector<8x16xbf16>, vector<16x1xbf16>, vector<8x1xf32> -> vector<8x1xf32>
    %95 = tpu.reciprocal %94 {approx = true} : vector<8x1xf32> -> vector<8x1xf32>
    %96 = vector.broadcast %95 : vector<8x1xf32> to vector<8x32xf32>
    %97 = arith.mulf %93, %96 : vector<8x32xf32>
    %c3 = arith.constant 3 : index
    %98 = memref.load %arg1[%c3] : memref<4xf32, #tpu.memory_space<smem>>
    %99 = vector.extract_strided_slice %6 {offsets = [0, 3], sizes = [8, 1], strides = [1, 1]} : vector<8x4xf32> to vector<8x1xf32>
    %100 = vector.extract_strided_slice %8 {offsets = [3, 0], sizes = [1, 16], strides = [1, 1]} : vector<4x16xf32> to vector<1x16xf32>
    %101 = vector.broadcast %98 : f32 to vector<8x16xf32>
    %102 = arith.mulf %101, %10 : vector<8x16xf32>
    %103 = vector.broadcast %100 : vector<1x16xf32> to vector<8x16xf32>
    %104 = arith.addf %103, %102 : vector<8x16xf32>
    %105 = vector.broadcast %99 : vector<8x1xf32> to vector<8x16xf32>
    %106 = arith.addf %105, %104 : vector<8x16xf32>
    %cst_34 = arith.constant 0.000000e+00 : f32
    %107 = vector.broadcast %cst_34 : f32 to vector<8x16xf32>
    %108 = arith.cmpf ogt, %106, %107 : vector<8x16xf32>
    %cst_35 = arith.constant 2.000000e-01 : f32
    %109 = vector.broadcast %cst_35 : f32 to vector<8x16xf32>
    %110 = arith.mulf %109, %106 : vector<8x16xf32>
    %111 = arith.select %108, %106, %110 : vector<8x16xi1>, vector<8x16xf32>
    %cst_36 = arith.constant -1.000000e+30 : f32
    %112 = vector.broadcast %cst_36 : f32 to vector<8x16xf32>
    %113 = arith.select %12, %111, %112 : vector<8x16xi1>, vector<8x16xf32>
    %cst_37 = arith.constant dense<0xFF800000> : vector<8xf32>
    %114 = vector.multi_reduction <maximumf>, %113, %cst_37 [1] : vector<8x16xf32> to vector<8xf32>
    %115 = vector.shape_cast %114 : vector<8xf32> to vector<8x1xf32>
    %116 = vector.broadcast %115 : vector<8x1xf32> to vector<8x16xf32>
    %117 = arith.subf %113, %116 : vector<8x16xf32>
    %118 = math.exp %117 : vector<8x16xf32>
    %119 = arith.truncf %118 : vector<8x16xf32> to vector<8x16xbf16>
    %120 = vector.extract_strided_slice %3 {offsets = [0, 96], sizes = [16, 32], strides = [1, 1]} : vector<16x128xbf16> to vector<16x32xbf16>
    %cst_38 = arith.constant dense<0.000000e+00> : vector<8x32xf32>
    %121 = tpu.matmul %119, %120, %cst_38 {dimension_numbers = #tpu.dot_dimension_numbers<[1], [0], [0], [1], [0, 0, 1, 1], [], []>} : vector<8x16xbf16>, vector<16x32xbf16>, vector<8x32xf32> -> vector<8x32xf32>
    %cst_39 = arith.constant dense<0.000000e+00> : vector<8x1xf32>
    %122 = tpu.matmul %119, %13, %cst_39 {dimension_numbers = #tpu.dot_dimension_numbers<[1], [0], [0], [1], [0, 0, 1, 1], [], []>} : vector<8x16xbf16>, vector<16x1xbf16>, vector<8x1xf32> -> vector<8x1xf32>
    %123 = tpu.reciprocal %122 {approx = true} : vector<8x1xf32> -> vector<8x1xf32>
    %124 = vector.broadcast %123 : vector<8x1xf32> to vector<8x32xf32>
    %125 = arith.mulf %121, %124 : vector<8x32xf32>
    %126 = tpu.concatenate %41, %69, %97, %125 in 1 : vector<8x32xf32>, vector<8x32xf32>, vector<8x32xf32>, vector<8x32xf32> -> vector<8x128xf32>
    %c0_40 = arith.constant 0 : index
    %c0_41 = arith.constant 0 : index
    %127 = vector.load %arg7[%c0_40, %c0_41] : memref<1x128xf32, #tpu.memory_space<vmem>>, vector<1x128xf32>
    %128 = vector.broadcast %127 : vector<1x128xf32> to vector<8x128xf32>
    %129 = arith.addf %126, %128 : vector<8x128xf32>
    %cst_42 = arith.constant 0.000000e+00 : f32
    %130 = vector.broadcast %cst_42 : f32 to vector<8x128xf32>
    %131 = arith.cmpf ogt, %129, %130 : vector<8x128xf32>
    %cst_43 = arith.constant 0.00999999977 : f32
    %132 = vector.broadcast %cst_43 : f32 to vector<8x128xf32>
    %133 = arith.mulf %132, %129 : vector<8x128xf32>
    %134 = arith.select %131, %129, %133 : vector<8x128xi1>, vector<8x128xf32>
    %135 = arith.truncf %134 : vector<8x128xf32> to vector<8x128xbf16>
    %c0_44 = arith.constant 0 : index
    %c0_45 = arith.constant 0 : index
    %136 = vector.load %arg9[%c0_44, %c0_45] : memref<8x128xbf16, #tpu.memory_space<vmem>>, vector<8x128xbf16>
    tpu.vector_store %arg9[%c0_44, %c0_45], %135 {strides = array<i32>} : memref<8x128xbf16, #tpu.memory_space<vmem>>, vector<8x128xbf16>,
    return
  }
  func.func @transform_0(%arg0: i32) -> i32 {
    %c0_i32 = arith.constant 0 : i32
    %c0_i32_0 = arith.constant 0 : i32
    return %c0_i32 : i32
  }
  func.func @transform_1(%arg0: i32) -> (i32, i32) {
    %c0_i32 = arith.constant 0 : i32
    %c0_i32_0 = arith.constant 0 : i32
    %c0_i32_1 = arith.constant 0 : i32
    return %c0_i32, %c0_i32_0 : i32, i32
  }
  func.func @transform_2(%arg0: i32) -> (i32, i32) {
    %c0_i32 = arith.constant 0 : i32
    %c0_i32_0 = arith.constant 0 : i32
    return %arg0, %c0_i32 : i32, i32
  }
  func.func @transform_3(%arg0: i32) -> (i32, i32) {
    %c0_i32 = arith.constant 0 : i32
    %c0_i32_0 = arith.constant 0 : i32
    %c0_i32_1 = arith.constant 0 : i32
    return %c0_i32, %c0_i32_0 : i32, i32
  }
  func.func @transform_4(%arg0: i32) -> (i32, i32) {
    %c0_i32 = arith.constant 0 : i32
    %c0_i32_0 = arith.constant 0 : i32
    %c0_i32_1 = arith.constant 0 : i32
    return %c0_i32, %c0_i32_0 : i32, i32
  }
  func.func @transform_5(%arg0: i32) -> (i32, i32) {
    %c0_i32 = arith.constant 0 : i32
    %c0_i32_0 = arith.constant 0 : i32
    %c0_i32_1 = arith.constant 0 : i32
    return %c0_i32, %c0_i32_0 : i32, i32
  }
  func.func @transform_6(%arg0: i32) -> (i32, i32) {
    %c0_i32 = arith.constant 0 : i32
    %c0_i32_0 = arith.constant 0 : i32
    %c0_i32_1 = arith.constant 0 : i32
    return %c0_i32, %c0_i32_0 : i32, i32
  }
  func.func @transform_7(%arg0: i32) -> (i32, i32) {
    %c0_i32 = arith.constant 0 : i32
    %c0_i32_0 = arith.constant 0 : i32
    return %arg0, %c0_i32 : i32, i32
  }
  func.func @transform_8(%arg0: i32) -> (i32, i32) {
    %c0_i32 = arith.constant 0 : i32
    %c0_i32_0 = arith.constant 0 : i32
    return %arg0, %c0_i32 : i32, i32
  }
}

</mosaic_0001>

<llo_original>
// kernel: tpu_custom_call.1
$region0: #{tpu_custom_call.1}
  #allocation0 [shape = 'u32[]', space=smem, size = 0x4, offset = 0x4, fixed_abs, tag = 'smem constant byte address 0x4 - core index']
  #allocation1 [shape = 'u32[144,128]{1,0:T(1,128)}', space=vmem, size = 0x12000, scoped, tag = 'internal scratch']
  %s0 = inlined_call_operand.vmem [shape: f32[4], index: 0, kind: input, shape index: {}]
  %s1 = inlined_call_operand.vmem [shape: bf16[16,8], index: 1, kind: input, shape index: {}]
  %s2 = inlined_call_operand.vmem [shape: bf16[16,8], index: 2, kind: input, shape index: {}]
  %s3 = inlined_call_operand.vmem [shape: bf16[8,128], index: 3, kind: input, shape index: {}]
  %s4 = inlined_call_operand.vmem [shape: bf16[4,8], index: 4, kind: input, shape index: {}]
  %s5 = inlined_call_operand.vmem [shape: bf16[8,4], index: 5, kind: input, shape index: {}]
  %s6 = inlined_call_operand.vmem [shape: f32[1,128], index: 6, kind: input, shape index: {}]
  %s7 = inlined_call_operand.vmem [shape: bf16[16,16], index: 7, kind: input, shape index: {}]
  %s8 = inlined_call_operand.hbm [shape: bf16[16,128], index: 8, kind: output, shape index: {}]
  %s9 = sld [smem:[#allocation0]]
  $region69: #{tpu_custom_call.1} parent=0
    _
  %s11 = ssub.s32 1, %s9
  %s12 = scalar_select 0, %s11, %s9
  $region1: #{tpu_custom_call.1} parent=0
    #allocation2 [shape = 'u8[512]{0}', space=smem, size = 0x200, scoped, tag = 'input window, operand 0, single buffered']
    #allocation3 [shape = 's32[2]{0}', space=sflag, size = 0x8, scoped, tag = 'scoped memory for tpu_custom_call.1']
    #allocation4 [shape = 's32[2]{0}', space=sflag, size = 0x8, scoped, tag = 'scoped memory for tpu_custom_call.1']
    #allocation5 [shape = 'u8[4096]{0}', space=vmem, size = 0x1000, scoped, tag = 'output window, operand 0']
    %13 = vsyncpa [#allocation4], 0
    %14 = vsyncpa [#allocation3], 0
    %s15 = scalar_lea.sflag [#allocation3], 1
    %16 = vsyncpa %s15, 0
    loop: start=0, step=1, limit=4
    $region2: #{tpu_custom_call.1} parent=1 // loop_pre_header
      _
    $region3: #{tpu_custom_call.1} parent=1 // loop_header
      %s18 = sphi 0, %s22
      %p19 = scmp.ge.s32.totalorder %s18, 4
      %s26 = sphi 0, %s26
      %s28 = sphi 0, %s26
      %s29 = sphi 0, %s28
      %s43 = sphi 0, %s29
      %s47 = sphi 0, %s47
      %s49 = sphi 0, %s47
      %s50 = sphi 0, %s49
      %s64 = sphi 0, %s50
      %s70 = sphi 0, %s72
      %s73 = sphi 0, %s70
      %s74 = sphi 0, %s73
      %s90 = sphi 0, %s74
      %s94 = sphi 0, %s94
      %s96 = sphi 0, %s94
      %s97 = sphi 0, %s96
      %s111 = sphi 0, %s97
      %s115 = sphi 0, %s115
      %s117 = sphi 0, %s115
      %s118 = sphi 0, %s117
      %s132 = sphi 0, %s118
      %s136 = sphi 0, %s136
      %s138 = sphi 0, %s136
      %s139 = sphi 0, %s138
      %s153 = sphi 0, %s139
      %s157 = sphi 0, %s157
      %s159 = sphi 0, %s157
      %s160 = sphi 0, %s159
      %s174 = sphi 0, %s160
      %s180 = sphi 0, %s182
      %s183 = sphi 0, %s180
      %s184 = sphi 0, %s183
      %s200 = sphi 0, %s184
      %s206 = sphi 0, %s208
      %s209 = sphi 0, %s206
      %s210 = sphi 0, %s209
      %s226 = sphi 0, %s210
    $region4: #{tpu_custom_call.1} parent=1 // loop_header_branch
      %21 = sbr.rel (%p19) target = $region8
    $region5: #{tpu_custom_call.1} parent=1 // loop_body
      %s23 = ssub.s32 %s18, 1
      %s24 = ssub.s32 %s18, 2
      %s25 = sadd.s32 %s18, 1
      %s27 = sadd.s32 %s26, 1
      %p30 = scmp.eq.s32.totalorder %s18, 1
      %p31 = scmp.ne.s32.totalorder %s26, %s28
      %p32 = scmp.eq.s32.totalorder %s18, 0
      %p33 = por %p31, %p32
      %p34 = scmp.ne.s32.totalorder %s26, %s28
      %p35 = scmp.eq.s32.totalorder %s23, 1
      %p36 = por %p34, %p35
      %p37 = scmp.ne.s32.totalorder %s28, %s29
      %p38 = scmp.eq.s32.totalorder %s23, 0
      %p39 = por %p37, %p38
      %p40 = scmp.ne.s32.totalorder %s28, %s29
      %p41 = scmp.eq.s32.totalorder %s24, 1
      %p42 = por %p40, %p41
      %p44 = scmp.ne.s32.totalorder %s29, %s43
      %p45 = scmp.eq.s32.totalorder %s24, 0
      %p46 = por %p44, %p45
      %s48 = sadd.s32 %s47, 1
      %p51 = scmp.eq.s32.totalorder %s18, 1
      %p52 = scmp.ne.s32.totalorder %s47, %s49
      %p53 = scmp.eq.s32.totalorder %s18, 0
      %p54 = por %p52, %p53
      %p55 = scmp.ne.s32.totalorder %s47, %s49
      %p56 = scmp.eq.s32.totalorder %s23, 1
      %p57 = por %p55, %p56
      %p58 = scmp.ne.s32.totalorder %s49, %s50
      %p59 = scmp.eq.s32.totalorder %s23, 0
      %p60 = por %p58, %p59
      %p61 = scmp.ne.s32.totalorder %s49, %s50
      %p62 = scmp.eq.s32.totalorder %s24, 1
      %p63 = por %p61, %p62
      %p65 = scmp.ne.s32.totalorder %s50, %s64
      %p66 = scmp.eq.s32.totalorder %s24, 0
      %p67 = por %p65, %p66
      %s68 = ssub.s32 %s18, %s25
      %p69 = scmp.eq.s32.totalorder %s68, 0
      %s71 = sadd.s32 %s70, 1
      %s72 = scalar_select %p69, %s70, %s71
      %p75 = pneg %p69
      %p76 = scmp.eq.s32.totalorder %s18, 1
      %p77 = por %p75, %p76
      %p78 = scmp.ne.s32.totalorder %s70, %s73
      %p79 = scmp.eq.s32.totalorder %s18, 0
      %p80 = por %p78, %p79
      %p81 = scmp.ne.s32.totalorder %s70, %s73
      %p82 = scmp.eq.s32.totalorder %s23, 1
      %p83 = por %p81, %p82
      %p84 = scmp.ne.s32.totalorder %s73, %s74
      %p85 = scmp.eq.s32.totalorder %s23, 0
      %p86 = por %p84, %p85
      %p87 = scmp.ne.s32.totalorder %s73, %s74
      %p88 = scmp.eq.s32.totalorder %s24, 1
      %p89 = por %p87, %p88
      %p91 = scmp.ne.s32.totalorder %s74, %s90
      %p92 = scmp.eq.s32.totalorder %s24, 0
      %p93 = por %p91, %p92
      %s95 = sadd.s32 %s94, 1
      %p98 = scmp.eq.s32.totalorder %s18, 1
      %p99 = scmp.ne.s32.totalorder %s94, %s96
      %p100 = scmp.eq.s32.totalorder %s18, 0
      %p101 = por %p99, %p100
      %p102 = scmp.ne.s32.totalorder %s94, %s96
      %p103 = scmp.eq.s32.totalorder %s23, 1
      %p104 = por %p102, %p103
      %p105 = scmp.ne.s32.totalorder %s96, %s97
      %p106 = scmp.eq.s32.totalorder %s23, 0
      %p107 = por %p105, %p106
      %p108 = scmp.ne.s32.totalorder %s96, %s97
      %p109 = scmp.eq.s32.totalorder %s24, 1
      %p110 = por %p108, %p109
      %p112 = scmp.ne.s32.totalorder %s97, %s111
      %p113 = scmp.eq.s32.totalorder %s24, 0
      %p114 = por %p112, %p113
      %s116 = sadd.s32 %s115, 1
      %p119 = scmp.eq.s32.totalorder %s18, 1
      %p120 = scmp.ne.s32.totalorder %s115, %s117
      %p121 = scmp.eq.s32.totalorder %s18, 0
      %p122 = por %p120, %p121
      %p123 = scmp.ne.s32.totalorder %s115, %s117
      %p124 = scmp.eq.s32.totalorder %s23, 1
      %p125 = por %p123, %p124
      %p126 = scmp.ne.s32.totalorder %s117, %s118
      %p127 = scmp.eq.s32.totalorder %s23, 0
      %p128 = por %p126, %p127
      %p129 = scmp.ne.s32.totalorder %s117, %s118
      %p130 = scmp.eq.s32.totalorder %s24, 1
      %p131 = por %p129, %p130
      %p133 = scmp.ne.s32.totalorder %s118, %s132
      %p134 = scmp.eq.s32.totalorder %s24, 0
      %p135 = por %p133, %p134
      %s137 = sadd.s32 %s136, 1
      %p140 = scmp.eq.s32.totalorder %s18, 1
      %p141 = scmp.ne.s32.totalorder %s136, %s138
      %p142 = scmp.eq.s32.totalorder %s18, 0
      %p143 = por %p141, %p142
      %p144 = scmp.ne.s32.totalorder %s136, %s138
      %p145 = scmp.eq.s32.totalorder %s23, 1
      %p146 = por %p144, %p145
      %p147 = scmp.ne.s32.totalorder %s138, %s139
      %p148 = scmp.eq.s32.totalorder %s23, 0
      %p149 = por %p147, %p148
      %p150 = scmp.ne.s32.totalorder %s138, %s139
      %p151 = scmp.eq.s32.totalorder %s24, 1
      %p152 = por %p150, %p151
      %p154 = scmp.ne.s32.totalorder %s139, %s153
      %p155 = scmp.eq.s32.totalorder %s24, 0
      %p156 = por %p154, %p155
      %s158 = sadd.s32 %s157, 1
      %p161 = scmp.eq.s32.totalorder %s18, 1
      %p162 = scmp.ne.s32.totalorder %s157, %s159
      %p163 = scmp.eq.s32.totalorder %s18, 0
      %p164 = por %p162, %p163
      %p165 = scmp.ne.s32.totalorder %s157, %s159
      %p166 = scmp.eq.s32.totalorder %s23, 1
      %p167 = por %p165, %p166
      %p168 = scmp.ne.s32.totalorder %s159, %s160
      %p169 = scmp.eq.s32.totalorder %s23, 0
      %p170 = por %p168, %p169
      %p171 = scmp.ne.s32.totalorder %s159, %s160
      %p172 = scmp.eq.s32.totalorder %s24, 1
      %p173 = por %p171, %p172
      %p175 = scmp.ne.s32.totalorder %s160, %s174
      %p176 = scmp.eq.s32.totalorder %s24, 0
      %p177 = por %p175, %p176
      %s178 = ssub.s32 %s18, %s25
      %p179 = scmp.eq.s32.totalorder %s178, 0
      %s181 = sadd.s32 %s180, 1
      %s182 = scalar_select %p179, %s180, %s181
      %p185 = pneg %p179
      %p186 = scmp.eq.s32.totalorder %s18, 1
      %p187 = por %p185, %p186
      %p188 = scmp.ne.s32.totalorder %s180, %s183
      %p189 = scmp.eq.s32.totalorder %s18, 0
      %p190 = por %p188, %p189
      %p191 = scmp.ne.s32.totalorder %s180, %s183
      %p192 = scmp.eq.s32.totalorder %s23, 1
      %p193 = por %p191, %p192
      %p194 = scmp.ne.s32.totalorder %s183, %s184
      %p195 = scmp.eq.s32.totalorder %s23, 0
      %p196 = por %p194, %p195
      %p197 = scmp.ne.s32.totalorder %s183, %s184
      %p198 = scmp.eq.s32.totalorder %s24, 1
      %p199 = por %p197, %p198
      %p201 = scmp.ne.s32.totalorder %s184, %s200
      %p202 = scmp.eq.s32.totalorder %s24, 0
      %p203 = por %p201, %p202
      %s204 = ssub.s32 %s18, %s25
      %p205 = scmp.eq.s32.totalorder %s204, 0
      %s207 = sadd.s32 %s206, 1
      %s208 = scalar_select %p205, %s206, %s207
      %p211 = pneg %p205
      %p212 = scmp.eq.s32.totalorder %s18, 1
      %p213 = por %p211, %p212
      %p214 = scmp.ne.s32.totalorder %s206, %s209
      %p215 = scmp.eq.s32.totalorder %s18, 0
      %p216 = por %p214, %p215
      %p217 = scmp.ne.s32.totalorder %s206, %s209
      %p218 = scmp.eq.s32.totalorder %s23, 1
      %p219 = por %p217, %p218
      %p220 = scmp.ne.s32.totalorder %s209, %s210
      %p221 = scmp.eq.s32.totalorder %s23, 0
      %p222 = por %p220, %p221
      %p223 = scmp.ne.s32.totalorder %s209, %s210
      %p224 = scmp.eq.s32.totalorder %s24, 1
      %p225 = por %p223, %p224
      %p227 = scmp.ne.s32.totalorder %s210, %s226
      %p228 = scmp.eq.s32.totalorder %s24, 0
      %p229 = por %p227, %p228
      %p230 = scmp.le.s32.totalorder 1, %s18
      %p231 = scmp.lt.s32.totalorder %s18, 3
      %p232 = pnand %p230, %p231
      %p233 = pneg %p232
      // Predicated region
      $region9: #{tpu_custom_call.1} parent=5 // pred_check
        _
      $region10: #{tpu_custom_call.1} parent=5 // pred_check_branch
        %235 = sbr.rel (%p232) target = $region12
      $region11: #{tpu_custom_call.1} parent=5 // pred_region
        %s236 = ssub.s32 %s18, 1
        // Predicated region
        $region13: #{tpu_custom_call.1} parent=11 // pred_check
          %p237 = pneg %p39
        $region14: #{tpu_custom_call.1} parent=11 // pred_check_branch
          %239 = sbr.rel (%p237) target = $region16
        $region15: #{tpu_custom_call.1} parent=11 // pred_region
          %s241 = ssub.s32 16, 16
          %242 = vsyncadd [#allocation4], %s241
          %s244 = sshll.u32 %s0, 4
          %s245 = int_to_ptr.vmem [resolvable:$true] %s244
          %247 = dma.vmem_to_smem %s245, 16, [#allocation2], [#allocation4]
        $region16: #{tpu_custom_call.1} parent=11 // pred_fallthru
          _
        // Predicated region
        $region17: #{tpu_custom_call.1} parent=11 // pred_check
          %p248 = pneg %p60
        $region18: #{tpu_custom_call.1} parent=11 // pred_check_branch
          %250 = sbr.rel (%p248) target = $region20
        $region19: #{tpu_custom_call.1} parent=11 // pred_region
          _
        $region20: #{tpu_custom_call.1} parent=11 // pred_fallthru
          _
        // Predicated region
        $region21: #{tpu_custom_call.1} parent=11 // pred_check
          %p251 = pneg %p107
        $region22: #{tpu_custom_call.1} parent=11 // pred_check_branch
          %253 = sbr.rel (%p251) target = $region24
        $region23: #{tpu_custom_call.1} parent=11 // pred_region
          _
        $region24: #{tpu_custom_call.1} parent=11 // pred_fallthru
          _
        // Predicated region
        $region25: #{tpu_custom_call.1} parent=11 // pred_check
          %p254 = pneg %p128
        $region26: #{tpu_custom_call.1} parent=11 // pred_check_branch
          %256 = sbr.rel (%p254) target = $region28
        $region27: #{tpu_custom_call.1} parent=11 // pred_region
          _
        $region28: #{tpu_custom_call.1} parent=11 // pred_fallthru
          _
        // Predicated region
        $region29: #{tpu_custom_call.1} parent=11 // pred_check
          %p257 = pneg %p149
        $region30: #{tpu_custom_call.1} parent=11 // pred_check_branch
          %259 = sbr.rel (%p257) target = $region32
        $region31: #{tpu_custom_call.1} parent=11 // pred_region
          _
        $region32: #{tpu_custom_call.1} parent=11 // pred_fallthru
          _
        // Predicated region
        $region33: #{tpu_custom_call.1} parent=11 // pred_check
          %p260 = pneg %p170
        $region34: #{tpu_custom_call.1} parent=11 // pred_check_branch
          %262 = sbr.rel (%p260) target = $region36
        $region35: #{tpu_custom_call.1} parent=11 // pred_region
          _
        $region36: #{tpu_custom_call.1} parent=11 // pred_fallthru
          _
      $region12: #{tpu_custom_call.1} parent=5 // pred_fallthru
        _
      %p263 = scmp.lt.s32.totalorder %s18, 2
      // Predicated region
      $region37: #{tpu_custom_call.1} parent=5 // pred_check
        %p264 = pneg %p263
      $region38: #{tpu_custom_call.1} parent=5 // pred_check_branch
        %266 = sbr.rel (%p264) target = $region40
      $region39: #{tpu_custom_call.1} parent=5 // pred_region
        // Predicated region
        $region41: #{tpu_custom_call.1} parent=39 // pred_check
          %p267 = pneg %p80
        $region42: #{tpu_custom_call.1} parent=39 // pred_check_branch
          %269 = sbr.rel (%p267) target = $region44
        $region43: #{tpu_custom_call.1} parent=39 // pred_region
          %p270 = scmp.lt.s32.totalorder %s18, 1
          %s271 = scalar_select %p270, %s18, 1
          %s272 = smul.addr %s271, 4
          %s273 = scalar_lea.vmem %s2, %s272
        $region44: #{tpu_custom_call.1} parent=39 // pred_fallthru
          _
        // Predicated region
        $region45: #{tpu_custom_call.1} parent=39 // pred_check
          %p274 = pneg %p190
        $region46: #{tpu_custom_call.1} parent=39 // pred_check_branch
          %276 = sbr.rel (%p274) target = $region48
        $region47: #{tpu_custom_call.1} parent=39 // pred_region
          %p277 = scmp.lt.s32.totalorder %s18, 1
          %s278 = scalar_select %p277, %s18, 1
          %s279 = smul.addr %s278, 4
          %s280 = scalar_lea.vmem %s7, %s279
        $region48: #{tpu_custom_call.1} parent=39 // pred_fallthru
          _
      $region40: #{tpu_custom_call.1} parent=5 // pred_fallthru
        _
      %p281 = scmp.le.s32.totalorder 1, %s18
      %p282 = scmp.lt.s32.totalorder %s18, 3
      %p283 = pnand %p281, %p282
      %p284 = pneg %p283
      // Predicated region
      $region49: #{tpu_custom_call.1} parent=5 // pred_check
        _
      $region50: #{tpu_custom_call.1} parent=5 // pred_check_branch
        %286 = sbr.rel (%p283) target = $region52
      $region51: #{tpu_custom_call.1} parent=5 // pred_region
        %s287 = ssub.s32 %s18, 1
        // Predicated region
        $region53: #{tpu_custom_call.1} parent=51 // pred_check
          %p288 = pneg %p39
        $region54: #{tpu_custom_call.1} parent=51 // pred_check_branch
          %290 = sbr.rel (%p288) target = $region56
        $region55: #{tpu_custom_call.1} parent=51 // pred_region
          %291 = dma.done [#allocation4], 16
        $region56: #{tpu_custom_call.1} parent=51 // pred_fallthru
          _
        %292 = sfence
        %p293 = pneg %p39
        %p294 = pneg %p36
        %p295 = pneg %p60
        %p296 = pneg %p57
        %p297 = scmp.lt.s32.totalorder %s23, 1
        %s298 = scalar_select %p297, %s23, 1
        %s299 = smul.addr %s298, 4
        %s300 = scalar_lea.vmem %s2, %s299
        %p301 = pneg %p86
        %p302 = pneg %p83
        %p303 = pneg %p107
        %p304 = pneg %p104
        %p305 = pneg %p128
        %p306 = pneg %p125
        %p307 = pneg %p149
        %p308 = pneg %p146
        %p309 = pneg %p170
        %p310 = pneg %p167
        %p311 = scmp.lt.s32.totalorder %s23, 1
        %s312 = scalar_select %p311, %s23, 1
        %s313 = smul.addr %s312, 4
        %s314 = scalar_lea.vmem %s7, %s313
        %p315 = pneg %p196
        %p316 = pneg %p193
        %p317 = pneg %p222
        %p318 = pneg %p219
        %s319 = sand.u32 %s209, 1
        %s320 = scalar_lea.sflag [#allocation3], %s319
        %s321 = sand.u32 %s209, 1
        %s322 = smul.addr %s321, 4
        %s323 = scalar_lea.vmem [#allocation5], %s322
        %p324 = scmp.lt.s32.totalorder %s23, 1
        %s325 = scalar_select %p324, %s23, 1
        %s326 = smul.addr %s325, 4
        %s327 = scalar_lea.vmem %s2, %s326
        %p328 = scmp.lt.s32.totalorder %s23, 1
        %s329 = scalar_select %p328, %s23, 1
        %s330 = smul.addr %s329, 4
        %s331 = scalar_lea.vmem %s7, %s330
        %v334 = vld [vmem:[%s1] sm:$0xf]
        %v335 = vld [vmem:[%s1 + $0x4] sm:$0xf]
        %v336 = vld [vmem:[%s3] sm:$0xf]
        %v339 = vunpack.c.l.b16 %v334
        %v340 = vunpack.c.l.b16 %v335
        %v341 = vpack.c.b16 %v340, %v339
        %vm342 = vcmask 64512
        %v344 = vsel %vm342, %v341, 0
        %vm346 = vcmask 1043456
        %v348 = vsel %vm346, %v336, 0
        %350 = vmatprep.subr.bf16.mxu0 0
        %351 = vmatpush1.bf16.msra.mxu0 0
        %352 = vmatprep.subr.bf16.mxu0 0
        %353 = vmatpush1.bf16.msra.mxu0 0
        %354 = vmatprep.subr.bf16.mxu0 0
        %355 = vmatpush1.bf16.msra.mxu0 0
        %356 = vmatprep.subr.bf16.mxu0 0
        %357 = vmatpush1.bf16.msra.mxu0 0
        %358 = vmatprep.subr.bf16.mxu0 0
        %359 = vmatpush1.bf16.msra.mxu0 0
        %360 = vmatprep.subr.bf16.mxu0 0
        %361 = vmatpush1.bf16.msra.mxu0 0
        %362 = vmatprep.subr.bf16.mxu0 0
        %363 = vmatpush1.bf16.msra.mxu0 0
        %364 = vmatprep.subr.bf16.mxu0 0
        %365 = vmatpush1.bf16.msra.mxu0 %v348
        %366 = vmatprep.subr.bf16.mxu0 0
        %367 = vmatpush2.bf16.msra.mxu0 0
        %368 = vmatprep.subr.bf16.mxu0 0
        %369 = vmatpush2.bf16.msra.mxu0 0
        %370 = vmatprep.subr.bf16.mxu0 0
        %371 = vmatpush2.bf16.msra.mxu0 0
        %372 = vmatprep.subr.bf16.mxu0 0
        %373 = vmatpush2.bf16.msra.mxu0 0
        %374 = vmatprep.subr.bf16.mxu0 0
        %375 = vmatpush2.bf16.msra.mxu0 0
        %376 = vmatprep.subr.bf16.mxu0 0
        %377 = vmatpush2.bf16.msra.mxu0 0
        %378 = vmatprep.subr.bf16.mxu0 0
        %379 = vmatpush2.bf16.msra.mxu0 0
        %380 = vmatprep.subr.bf16.mxu0 0
        %381 = vmatpush2.bf16.msra.mxu0 0
        %382 = vmatprep.mubr.bf16.mxu0 0
        %383 = vmatmul.mubr.bf16.gmra.mxu0 %v344
        %v384 = vpop.f32.mrf.mxu0
        %v385 = vadd.f32 0.0, %v384
        %v386 = vpop.f32.mrf.mxu0
        %v387 = vpop.f32.mrf.mxu0
        %v388 = vadd.f32 0.0, %v387
        %v389 = vpop.f32.mrf.mxu0
        %390 = vdwg.mxu0
        %v391 = vpack.c.bf16 %v388, %v385
        %v392 = vld [vmem:[%s327] sm:$0xf]
        %v393 = vld [vmem:[%s5] sm:$0xf]
        %v395 = vsel %vm342, %v392, 0
        %v398 = vsel %vm346, %v393, 0
        %400 = vmatprep.subr.bf16.mxu0 0
        %401 = vmatpush1.bf16.msra.mxu0 0
        %402 = vmatprep.subr.bf16.mxu0 0
        %403 = vmatpush1.bf16.msra.mxu0 0
        %404 = vmatprep.subr.bf16.mxu0 0
        %405 = vmatpush1.bf16.msra.mxu0 0
        %406 = vmatprep.subr.bf16.mxu0 0
        %407 = vmatpush1.bf16.msra.mxu0 0
        %408 = vmatprep.subr.bf16.mxu0 0
        %409 = vmatpush1.bf16.msra.mxu0 0
        %410 = vmatprep.subr.bf16.mxu0 0
        %411 = vmatpush1.bf16.msra.mxu0 0
        %412 = vmatprep.subr.bf16.mxu0 0
        %413 = vmatpush1.bf16.msra.mxu0 0
        %414 = vmatprep.subr.bf16.mxu0 0
        %415 = vmatpush1.bf16.msra.mxu0 %v398
        %416 = vmatprep.subr.bf16.mxu0 0
        %417 = vmatpush2.bf16.msra.mxu0 0
        %418 = vmatprep.subr.bf16.mxu0 0
        %419 = vmatpush2.bf16.msra.mxu0 0
        %420 = vmatprep.subr.bf16.mxu0 0
        %421 = vmatpush2.bf16.msra.mxu0 0
        %422 = vmatprep.subr.bf16.mxu0 0
        %423 = vmatpush2.bf16.msra.mxu0 0
        %424 = vmatprep.subr.bf16.mxu0 0
        %425 = vmatpush2.bf16.msra.mxu0 0
        %426 = vmatprep.subr.bf16.mxu0 0
        %427 = vmatpush2.bf16.msra.mxu0 0
        %428 = vmatprep.subr.bf16.mxu0 0
        %429 = vmatpush2.bf16.msra.mxu0 0
        %430 = vmatprep.subr.bf16.mxu0 0
        %431 = vmatpush2.bf16.msra.mxu0 0
        %432 = vmatprep.mubr.bf16.mxu0 0
        %433 = vmatmul.mubr.bf16.gmra.mxu0 %v395
        %v434 = vpop.f32.mrf.mxu0
        %v435 = vadd.f32 0.0, %v434
        %v436 = vpop.f32.mrf.mxu0
        %v437 = vpop.f32.mrf.mxu0
        %v438 = vpop.f32.mrf.mxu0
        %439 = vdwg.mxu0
        %v440 = vld [vmem:[%s4] sm:$0x3]
        %v442 = vsel %vm342, %v440, 0
        %444 = vmatprep.subr.bf16.mxu0 0
        %445 = vmatpush1.bf16.xpose.msra.mxu0 0
        %446 = vmatprep.subr.bf16.mxu0 0
        %447 = vmatpush1.bf16.xpose.msra.mxu0 0
        %448 = vmatprep.subr.bf16.mxu0 0
        %449 = vmatpush1.bf16.xpose.msra.mxu0 0
        %450 = vmatprep.subr.bf16.mxu0 0
        %451 = vmatpush1.bf16.xpose.msra.mxu0 0
        %452 = vmatprep.subr.bf16.mxu0 0
        %453 = vmatpush1.bf16.xpose.msra.mxu0 0
        %454 = vmatprep.subr.bf16.mxu0 0
        %455 = vmatpush1.bf16.xpose.msra.mxu0 0
        %456 = vmatprep.subr.bf16.mxu0 0
        %457 = vmatpush1.bf16.xpose.msra.mxu0 0
        %458 = vmatprep.subr.bf16.mxu0 0
        %459 = vmatpush1.bf16.xpose.msra.mxu0 %v344
        %460 = vmatprep.subr.bf16.mxu0 0
        %461 = vmatpush2.bf16.xpose.msra.mxu0 0
        %462 = vmatprep.subr.bf16.mxu0 0
        %463 = vmatpush2.bf16.xpose.msra.mxu0 0
        %464 = vmatprep.subr.bf16.mxu0 0
        %465 = vmatpush2.bf16.xpose.msra.mxu0 0
        %466 = vmatprep.subr.bf16.mxu0 0
        %467 = vmatpush2.bf16.xpose.msra.mxu0 0
        %468 = vmatprep.subr.bf16.mxu0 0
        %469 = vmatpush2.bf16.xpose.msra.mxu0 0
        %470 = vmatprep.subr.bf16.mxu0 0
        %471 = vmatpush2.bf16.xpose.msra.mxu0 0
        %472 = vmatprep.subr.bf16.mxu0 0
        %473 = vmatpush2.bf16.xpose.msra.mxu0 0
        %474 = vmatprep.subr.bf16.mxu0 0
        %475 = vmatpush2.bf16.xpose.msra.mxu0 0
        %476 = vmatprep.mubr.bf16.mxu0 0
        %477 = vmatmul.mubr.bf16.gmra.mxu0 %v442
        %v478 = vpop.f32.mrf.mxu0
        %v479 = vadd.f32 0.0, %v478
        %v480 = vpop.f32.mrf.mxu0
        %v481 = vpop.f32.mrf.mxu0
        %v482 = vpop.f32.mrf.mxu0
        %483 = vdwg.mxu0
        %v484 = vld [vmem:[%s331] sm:$0xf]
        %v485 = vunpack.c.l.bf16 %v484
        %vm486 = vcmp.ge.f32.partialorder %v485, 0.0
        %s487 = sld [smem:[#allocation2]]
        %v488 = vstv %s487
        %v489 = vmul.f32 %v488, %v485
        %v490 = vlaneseq
        %v491 = vshrl.u32 %v490, 7
        %v492 = vsub.s32 0, %v491
        %v493 = vrot.slane %v479, %v492
        %v494 = vadd.f32 %v493, %v489
        %496 = vset.pattern.permute.xlu0 0
        %497 = vperm.xlu0 %496, %v435
        %v498 = vpop.permute.xlu0 %497
        %v500 = vadd.f32 %v498, %v494
        %vm501 = vcmp.gt.f32.partialorder %v500, 0.0
        %v502 = vmul.f32 %v500, 0.2
        %v503 = vsel %vm501, %v500, %v502
        %v504 = vsel %vm486, %v503, -1e+30
        %vm505 = vcmask 130048
        %v506 = vsel %vm505, %v504, -inf
        %507 = vmax.xlane.f32.xlu0 %v506
        %v508 = vpop.xlane.xlu0 %507
        %v509 = vsub.f32 %v504, %v508
        %v510 = vmul.f32 %v509, 1.442695
        %v511 = vpow.pop %v510
        %v512 = vpack.c.bf16 %v511, %v511
        %v514 = vsel %vm505, %v512, 0
        %516 = vmatprep.subr.bf16.mxu0 0
        %517 = vmatpush1.bf16.msra.mxu0 0
        %518 = vmatprep.subr.bf16.mxu0 0
        %519 = vmatpush1.bf16.msra.mxu0 0
        %520 = vmatprep.subr.bf16.mxu0 0
        %521 = vmatpush1.bf16.msra.mxu0 0
        %522 = vmatprep.subr.bf16.mxu0 0
        %523 = vmatpush1.bf16.msra.mxu0 0
        %524 = vmatprep.subr.bf16.mxu0 0
        %525 = vmatpush1.bf16.msra.mxu0 0
        %526 = vmatprep.subr.bf16.mxu0 0
        %527 = vmatpush1.bf16.msra.mxu0 0
        %528 = vmatprep.subr.bf16.mxu0 0
        %529 = vmatpush1.bf16.msra.mxu0 0
        %530 = vmatprep.subr.bf16.mxu0 0
        %531 = vmatpush1.bf16.msra.mxu0 %v391
        %532 = vmatprep.subr.bf16.mxu0 0
        %533 = vmatpush2.bf16.msra.mxu0 0
        %534 = vmatprep.subr.bf16.mxu0 0
        %535 = vmatpush2.bf16.msra.mxu0 0
        %536 = vmatprep.subr.bf16.mxu0 0
        %537 = vmatpush2.bf16.msra.mxu0 0
        %538 = vmatprep.subr.bf16.mxu0 0
        %539 = vmatpush2.bf16.msra.mxu0 0
        %540 = vmatprep.subr.bf16.mxu0 0
        %541 = vmatpush2.bf16.msra.mxu0 0
        %542 = vmatprep.subr.bf16.mxu0 0
        %543 = vmatpush2.bf16.msra.mxu0 0
        %544 = vmatprep.subr.bf16.mxu0 0
        %545 = vmatpush2.bf16.msra.mxu0 0
        %546 = vmatprep.subr.bf16.mxu0 0
        %547 = vmatpush2.bf16.msra.mxu0 0
        %548 = vmatprep.mubr.bf16.mxu0 0
        %549 = vmatmul.mubr.bf16.gmra.mxu0 %v514
        %v550 = vpop.f32.mrf.mxu0
        %v551 = vadd.f32 0.0, %v550
        %v552 = vpop.f32.mrf.mxu0
        %v553 = vpop.f32.mrf.mxu0
        %v554 = vpop.f32.mrf.mxu0
        %555 = vdwg.mxu0
        %556 = vmatprep.subr.bf16.mxu0 0
        %557 = vmatpush1.bf16.msra.mxu0 0
        %558 = vmatprep.subr.bf16.mxu0 0
        %559 = vmatpush1.bf16.msra.mxu0 0
        %560 = vmatprep.subr.bf16.mxu0 0
        %561 = vmatpush1.bf16.msra.mxu0 0
        %562 = vmatprep.subr.bf16.mxu0 0
        %563 = vmatpush1.bf16.msra.mxu0 0
        %564 = vmatprep.subr.bf16.mxu0 0
        %565 = vmatpush1.bf16.msra.mxu0 0
        %566 = vmatprep.subr.bf16.mxu0 0
        %567 = vmatpush1.bf16.msra.mxu0 0
        %568 = vmatprep.subr.bf16.mxu0 0
        %569 = vmatpush1.bf16.msra.mxu0 0
        %570 = vmatprep.subr.bf16.mxu0 0
        %571 = vmatpush1.bf16.msra.mxu0 1065369472
        %572 = vmatprep.subr.bf16.mxu0 0
        %573 = vmatpush2.bf16.msra.mxu0 0
        %574 = vmatprep.subr.bf16.mxu0 0
        %575 = vmatpush2.bf16.msra.mxu0 0
        %576 = vmatprep.subr.bf16.mxu0 0
        %577 = vmatpush2.bf16.msra.mxu0 0
        %578 = vmatprep.subr.bf16.mxu0 0
        %579 = vmatpush2.bf16.msra.mxu0 0
        %580 = vmatprep.subr.bf16.mxu0 0
        %581 = vmatpush2.bf16.msra.mxu0 0
        %582 = vmatprep.subr.bf16.mxu0 0
        %583 = vmatpush2.bf16.msra.mxu0 0
        %584 = vmatprep.subr.bf16.mxu0 0
        %585 = vmatpush2.bf16.msra.mxu0 0
        %586 = vmatprep.subr.bf16.mxu0 0
        %587 = vmatpush2.bf16.msra.mxu0 0
        %588 = vmatprep.mubr.bf16.mxu0 0
        %589 = vmatmul.mubr.bf16.gmra.mxu0 %v514
        %v590 = vpop.f32.mrf.mxu0
        %v591 = vadd.f32 0.0, %v590
        %v592 = vpop.f32.mrf.mxu0
        %v593 = vpop.f32.mrf.mxu0
        %v594 = vpop.f32.mrf.mxu0
        %595 = vdwg.mxu0
        %v596 = vrcp.pop %v591
        %598 = vset.pattern.permute.xlu0 0
        %599 = vperm.xlu0 %598, %v596
        %v600 = vpop.permute.xlu0 %599
        %v602 = vmul.f32 %v551, %v600
        %s603 = sld [smem:[#allocation2 + $0x1]]
        %v604 = vstv %s603
        %v605 = vmul.f32 %v604, %v485
        %v606 = vlaneseq
        %v607 = vshrl.u32 %v606, 7
        %v608 = vsub.s32 1, %v607
        %v609 = vrot.slane %v479, %v608
        %v610 = vadd.f32 %v609, %v605
        %611 = vset.pattern.permute.xlu0 1
        %612 = vperm.xlu0 %611, %v435
        %v613 = vpop.permute.xlu0 %612
        %v615 = vadd.f32 %v613, %v610
        %vm616 = vcmp.gt.f32.partialorder %v615, 0.0
        %v617 = vmul.f32 %v615, 0.2
        %v618 = vsel %vm616, %v615, %v617
        %v619 = vsel %vm486, %v618, -1e+30
        %v620 = vsel %vm505, %v619, -inf
        %621 = vmax.xlane.f32.xlu0 %v620
        %v622 = vpop.xlane.xlu0 %621
        %v623 = vsub.f32 %v619, %v622
        %v624 = vmul.f32 %v623, 1.442695
        %v625 = vpow.pop %v624
        %v626 = vpack.c.bf16 %v625, %v625
        %628 = vrot.lane.b32.xlu0 %v391, 96
        %v629 = vpop.permute.xlu0 %628
        %v632 = vsel %vm505, %v626, 0
        %634 = vmatprep.subr.bf16.mxu0 0
        %635 = vmatpush1.bf16.msra.mxu0 0
        %636 = vmatprep.subr.bf16.mxu0 0
        %637 = vmatpush1.bf16.msra.mxu0 0
        %638 = vmatprep.subr.bf16.mxu0 0
        %639 = vmatpush1.bf16.msra.mxu0 0
        %640 = vmatprep.subr.bf16.mxu0 0
        %641 = vmatpush1.bf16.msra.mxu0 0
        %642 = vmatprep.subr.bf16.mxu0 0
        %643 = vmatpush1.bf16.msra.mxu0 0
        %644 = vmatprep.subr.bf16.mxu0 0
        %645 = vmatpush1.bf16.msra.mxu0 0
        %646 = vmatprep.subr.bf16.mxu0 0
        %647 = vmatpush1.bf16.msra.mxu0 0
        %648 = vmatprep.subr.bf16.mxu0 0
        %649 = vmatpush1.bf16.msra.mxu0 %v629
        %650 = vmatprep.subr.bf16.mxu0 0
        %651 = vmatpush2.bf16.msra.mxu0 0
        %652 = vmatprep.subr.bf16.mxu0 0
        %653 = vmatpush2.bf16.msra.mxu0 0
        %654 = vmatprep.subr.bf16.mxu0 0
        %655 = vmatpush2.bf16.msra.mxu0 0
        %656 = vmatprep.subr.bf16.mxu0 0
        %657 = vmatpush2.bf16.msra.mxu0 0
        %658 = vmatprep.subr.bf16.mxu0 0
        %659 = vmatpush2.bf16.msra.mxu0 0
        %660 = vmatprep.subr.bf16.mxu0 0
        %661 = vmatpush2.bf16.msra.mxu0 0
        %662 = vmatprep.subr.bf16.mxu0 0
        %663 = vmatpush2.bf16.msra.mxu0 0
        %664 = vmatprep.subr.bf16.mxu0 0
        %665 = vmatpush2.bf16.msra.mxu0 0
        %666 = vmatprep.mubr.bf16.mxu0 0
        %667 = vmatmul.mubr.bf16.gmra.mxu0 %v632
        %v668 = vpop.f32.mrf.mxu0
        %v669 = vadd.f32 0.0, %v668
        %v670 = vpop.f32.mrf.mxu0
        %v671 = vpop.f32.mrf.mxu0
        %v672 = vpop.f32.mrf.mxu0
        %673 = vdwg.mxu0
        %674 = vmatprep.subr.bf16.mxu0 0
        %675 = vmatpush1.bf16.msra.mxu0 0
        %676 = vmatprep.subr.bf16.mxu0 0
        %677 = vmatpush1.bf16.msra.mxu0 0
        %678 = vmatprep.subr.bf16.mxu0 0
        %679 = vmatpush1.bf16.msra.mxu0 0
        %680 = vmatprep.subr.bf16.mxu0 0
        %681 = vmatpush1.bf16.msra.mxu0 0
        %682 = vmatprep.subr.bf16.mxu0 0
        %683 = vmatpush1.bf16.msra.mxu0 0
        %684 = vmatprep.subr.bf16.mxu0 0
        %685 = vmatpush1.bf16.msra.mxu0 0
        %686 = vmatprep.subr.bf16.mxu0 0
        %687 = vmatpush1.bf16.msra.mxu0 0
        %688 = vmatprep.subr.bf16.mxu0 0
        %689 = vmatpush1.bf16.msra.mxu0 1065369472
        %690 = vmatprep.subr.bf16.mxu0 0
        %691 = vmatpush2.bf16.msra.mxu0 0
        %692 = vmatprep.subr.bf16.mxu0 0
        %693 = vmatpush2.bf16.msra.mxu0 0
        %694 = vmatprep.subr.bf16.mxu0 0
        %695 = vmatpush2.bf16.msra.mxu0 0
        %696 = vmatprep.subr.bf16.mxu0 0
        %697 = vmatpush2.bf16.msra.mxu0 0
        %698 = vmatprep.subr.bf16.mxu0 0
        %699 = vmatpush2.bf16.msra.mxu0 0
        %700 = vmatprep.subr.bf16.mxu0 0
        %701 = vmatpush2.bf16.msra.mxu0 0
        %702 = vmatprep.subr.bf16.mxu0 0
        %703 = vmatpush2.bf16.msra.mxu0 0
        %704 = vmatprep.subr.bf16.mxu0 0
        %705 = vmatpush2.bf16.msra.mxu0 0
        %706 = vmatprep.mubr.bf16.mxu0 0
        %707 = vmatmul.mubr.bf16.gmra.mxu0 %v632
        %v708 = vpop.f32.mrf.mxu0
        %v709 = vadd.f32 0.0, %v708
        %v710 = vpop.f32.mrf.mxu0
        %v711 = vpop.f32.mrf.mxu0
        %v712 = vpop.f32.mrf.mxu0
        %713 = vdwg.mxu0
        %v714 = vrcp.pop %v709
        %716 = vset.pattern.permute.xlu0 0
        %717 = vperm.xlu0 %716, %v714
        %v718 = vpop.permute.xlu0 %717
        %v720 = vmul.f32 %v669, %v718
        %s721 = sld [smem:[#allocation2 + $0x2]]
        %v722 = vstv %s721
        %v723 = vmul.f32 %v722, %v485
        %v724 = vlaneseq
        %v725 = vshrl.u32 %v724, 7
        %v726 = vsub.s32 2, %v725
        %v727 = vrot.slane %v479, %v726
        %v728 = vadd.f32 %v727, %v723
        %729 = vset.pattern.permute.xlu0 2
        %730 = vperm.xlu0 %729, %v435
        %v731 = vpop.permute.xlu0 %730
        %v733 = vadd.f32 %v731, %v728
        %vm734 = vcmp.gt.f32.partialorder %v733, 0.0
        %v735 = vmul.f32 %v733, 0.2
        %v736 = vsel %vm734, %v733, %v735
        %v737 = vsel %vm486, %v736, -1e+30
        %v738 = vsel %vm505, %v737, -inf
        %739 = vmax.xlane.f32.xlu0 %v738
        %v740 = vpop.xlane.xlu0 %739
        %v741 = vsub.f32 %v737, %v740
        %v742 = vmul.f32 %v741, 1.442695
        %v743 = vpow.pop %v742
        %v744 = vpack.c.bf16 %v743, %v743
        %745 = vrot.lane.b32.xlu0 %v391, 64
        %v746 = vpop.permute.xlu0 %745
        %v749 = vsel %vm505, %v744, 0
        %751 = vmatprep.subr.bf16.mxu0 0
        %752 = vmatpush1.bf16.msra.mxu0 0
        %753 = vmatprep.subr.bf16.mxu0 0
        %754 = vmatpush1.bf16.msra.mxu0 0
        %755 = vmatprep.subr.bf16.mxu0 0
        %756 = vmatpush1.bf16.msra.mxu0 0
        %757 = vmatprep.subr.bf16.mxu0 0
        %758 = vmatpush1.bf16.msra.mxu0 0
        %759 = vmatprep.subr.bf16.mxu0 0
        %760 = vmatpush1.bf16.msra.mxu0 0
        %761 = vmatprep.subr.bf16.mxu0 0
        %762 = vmatpush1.bf16.msra.mxu0 0
        %763 = vmatprep.subr.bf16.mxu0 0
        %764 = vmatpush1.bf16.msra.mxu0 0
        %765 = vmatprep.subr.bf16.mxu0 0
        %766 = vmatpush1.bf16.msra.mxu0 %v746
        %767 = vmatprep.subr.bf16.mxu0 0
        %768 = vmatpush2.bf16.msra.mxu0 0
        %769 = vmatprep.subr.bf16.mxu0 0
        %770 = vmatpush2.bf16.msra.mxu0 0
        %771 = vmatprep.subr.bf16.mxu0 0
        %772 = vmatpush2.bf16.msra.mxu0 0
        %773 = vmatprep.subr.bf16.mxu0 0
        %774 = vmatpush2.bf16.msra.mxu0 0
        %775 = vmatprep.subr.bf16.mxu0 0
        %776 = vmatpush2.bf16.msra.mxu0 0
        %777 = vmatprep.subr.bf16.mxu0 0
        %778 = vmatpush2.bf16.msra.mxu0 0
        %779 = vmatprep.subr.bf16.mxu0 0
        %780 = vmatpush2.bf16.msra.mxu0 0
        %781 = vmatprep.subr.bf16.mxu0 0
        %782 = vmatpush2.bf16.msra.mxu0 0
        %783 = vmatprep.mubr.bf16.mxu0 0
        %784 = vmatmul.mubr.bf16.gmra.mxu0 %v749
        %v785 = vpop.f32.mrf.mxu0
        %v786 = vadd.f32 0.0, %v785
        %v787 = vpop.f32.mrf.mxu0
        %v788 = vpop.f32.mrf.mxu0
        %v789 = vpop.f32.mrf.mxu0
        %790 = vdwg.mxu0
        %791 = vmatprep.subr.bf16.mxu0 0
        %792 = vmatpush1.bf16.msra.mxu0 0
        %793 = vmatprep.subr.bf16.mxu0 0
        %794 = vmatpush1.bf16.msra.mxu0 0
        %795 = vmatprep.subr.bf16.mxu0 0
        %796 = vmatpush1.bf16.msra.mxu0 0
        %797 = vmatprep.subr.bf16.mxu0 0
        %798 = vmatpush1.bf16.msra.mxu0 0
        %799 = vmatprep.subr.bf16.mxu0 0
        %800 = vmatpush1.bf16.msra.mxu0 0
        %801 = vmatprep.subr.bf16.mxu0 0
        %802 = vmatpush1.bf16.msra.mxu0 0
        %803 = vmatprep.subr.bf16.mxu0 0
        %804 = vmatpush1.bf16.msra.mxu0 0
        %805 = vmatprep.subr.bf16.mxu0 0
        %806 = vmatpush1.bf16.msra.mxu0 1065369472
        %807 = vmatprep.subr.bf16.mxu0 0
        %808 = vmatpush2.bf16.msra.mxu0 0
        %809 = vmatprep.subr.bf16.mxu0 0
        %810 = vmatpush2.bf16.msra.mxu0 0
        %811 = vmatprep.subr.bf16.mxu0 0
        %812 = vmatpush2.bf16.msra.mxu0 0
        %813 = vmatprep.subr.bf16.mxu0 0
        %814 = vmatpush2.bf16.msra.mxu0 0
        %815 = vmatprep.subr.bf16.mxu0 0
        %816 = vmatpush2.bf16.msra.mxu0 0
        %817 = vmatprep.subr.bf16.mxu0 0
        %818 = vmatpush2.bf16.msra.mxu0 0
        %819 = vmatprep.subr.bf16.mxu0 0
        %820 = vmatpush2.bf16.msra.mxu0 0
        %821 = vmatprep.subr.bf16.mxu0 0
        %822 = vmatpush2.bf16.msra.mxu0 0
        %823 = vmatprep.mubr.bf16.mxu0 0
        %824 = vmatmul.mubr.bf16.gmra.mxu0 %v749
        %v825 = vpop.f32.mrf.mxu0
        %v826 = vadd.f32 0.0, %v825
        %v827 = vpop.f32.mrf.mxu0
        %v828 = vpop.f32.mrf.mxu0
        %v829 = vpop.f32.mrf.mxu0
        %830 = vdwg.mxu0
        %v831 = vrcp.pop %v826
        %833 = vset.pattern.permute.xlu0 0
        %834 = vperm.xlu0 %833, %v831
        %v835 = vpop.permute.xlu0 %834
        %v837 = vmul.f32 %v786, %v835
        %s838 = sld [smem:[#allocation2 + $0x3]]
        %v839 = vstv %s838
        %v840 = vmul.f32 %v839, %v485
        %v841 = vlaneseq
        %v842 = vshrl.u32 %v841, 7
        %v843 = vsub.s32 3, %v842
        %v844 = vrot.slane %v479, %v843
        %v845 = vadd.f32 %v844, %v840
        %846 = vset.pattern.permute.xlu0 3
        %847 = vperm.xlu0 %846, %v435
        %v848 = vpop.permute.xlu0 %847
        %v850 = vadd.f32 %v848, %v845
        %vm851 = vcmp.gt.f32.partialorder %v850, 0.0
        %v852 = vmul.f32 %v850, 0.2
        %v853 = vsel %vm851, %v850, %v852
        %v854 = vsel %vm486, %v853, -1e+30
        %v855 = vsel %vm505, %v854, -inf
        %856 = vmax.xlane.f32.xlu0 %v855
        %v857 = vpop.xlane.xlu0 %856
        %v858 = vsub.f32 %v854, %v857
        %v859 = vmul.f32 %v858, 1.442695
        %v860 = vpow.pop %v859
        %v861 = vpack.c.bf16 %v860, %v860
        %862 = vrot.lane.b32.xlu0 %v391, 32
        %v863 = vpop.permute.xlu0 %862
        %v866 = vsel %vm505, %v861, 0
        %868 = vmatprep.subr.bf16.mxu0 0
        %869 = vmatpush1.bf16.msra.mxu0 0
        %870 = vmatprep.subr.bf16.mxu0 0
        %871 = vmatpush1.bf16.msra.mxu0 0
        %872 = vmatprep.subr.bf16.mxu0 0
        %873 = vmatpush1.bf16.msra.mxu0 0
        %874 = vmatprep.subr.bf16.mxu0 0
        %875 = vmatpush1.bf16.msra.mxu0 0
        %876 = vmatprep.subr.bf16.mxu0 0
        %877 = vmatpush1.bf16.msra.mxu0 0
        %878 = vmatprep.subr.bf16.mxu0 0
        %879 = vmatpush1.bf16.msra.mxu0 0
        %880 = vmatprep.subr.bf16.mxu0 0
        %881 = vmatpush1.bf16.msra.mxu0 0
        %882 = vmatprep.subr.bf16.mxu0 0
        %883 = vmatpush1.bf16.msra.mxu0 %v863
        %884 = vmatprep.subr.bf16.mxu0 0
        %885 = vmatpush2.bf16.msra.mxu0 0
        %886 = vmatprep.subr.bf16.mxu0 0
        %887 = vmatpush2.bf16.msra.mxu0 0
        %888 = vmatprep.subr.bf16.mxu0 0
        %889 = vmatpush2.bf16.msra.mxu0 0
        %890 = vmatprep.subr.bf16.mxu0 0
        %891 = vmatpush2.bf16.msra.mxu0 0
        %892 = vmatprep.subr.bf16.mxu0 0
        %893 = vmatpush2.bf16.msra.mxu0 0
        %894 = vmatprep.subr.bf16.mxu0 0
        %895 = vmatpush2.bf16.msra.mxu0 0
        %896 = vmatprep.subr.bf16.mxu0 0
        %897 = vmatpush2.bf16.msra.mxu0 0
        %898 = vmatprep.subr.bf16.mxu0 0
        %899 = vmatpush2.bf16.msra.mxu0 0
        %900 = vmatprep.mubr.bf16.mxu0 0
        %901 = vmatmul.mubr.bf16.gmra.mxu0 %v866
        %v902 = vpop.f32.mrf.mxu0
        %v903 = vadd.f32 0.0, %v902
        %v904 = vpop.f32.mrf.mxu0
        %v905 = vpop.f32.mrf.mxu0
        %v906 = vpop.f32.mrf.mxu0
        %907 = vdwg.mxu0
        %908 = vmatprep.subr.bf16.mxu0 0
        %909 = vmatpush1.bf16.msra.mxu0 0
        %910 = vmatprep.subr.bf16.mxu0 0
        %911 = vmatpush1.bf16.msra.mxu0 0
        %912 = vmatprep.subr.bf16.mxu0 0
        %913 = vmatpush1.bf16.msra.mxu0 0
        %914 = vmatprep.subr.bf16.mxu0 0
        %915 = vmatpush1.bf16.msra.mxu0 0
        %916 = vmatprep.subr.bf16.mxu0 0
        %917 = vmatpush1.bf16.msra.mxu0 0
        %918 = vmatprep.subr.bf16.mxu0 0
        %919 = vmatpush1.bf16.msra.mxu0 0
        %920 = vmatprep.subr.bf16.mxu0 0
        %921 = vmatpush1.bf16.msra.mxu0 0
        %922 = vmatprep.subr.bf16.mxu0 0
        %923 = vmatpush1.bf16.msra.mxu0 1065369472
        %924 = vmatprep.subr.bf16.mxu0 0
        %925 = vmatpush2.bf16.msra.mxu0 0
        %926 = vmatprep.subr.bf16.mxu0 0
        %927 = vmatpush2.bf16.msra.mxu0 0
        %928 = vmatprep.subr.bf16.mxu0 0
        %929 = vmatpush2.bf16.msra.mxu0 0
        %930 = vmatprep.subr.bf16.mxu0 0
        %931 = vmatpush2.bf16.msra.mxu0 0
        %932 = vmatprep.subr.bf16.mxu0 0
        %933 = vmatpush2.bf16.msra.mxu0 0
        %934 = vmatprep.subr.bf16.mxu0 0
        %935 = vmatpush2.bf16.msra.mxu0 0
        %936 = vmatprep.subr.bf16.mxu0 0
        %937 = vmatpush2.bf16.msra.mxu0 0
        %938 = vmatprep.subr.bf16.mxu0 0
        %939 = vmatpush2.bf16.msra.mxu0 0
        %940 = vmatprep.mubr.bf16.mxu0 0
        %941 = vmatmul.mubr.bf16.gmra.mxu0 %v866
        %v942 = vpop.f32.mrf.mxu0
        %v943 = vadd.f32 0.0, %v942
        %v944 = vpop.f32.mrf.mxu0
        %v945 = vpop.f32.mrf.mxu0
        %v946 = vpop.f32.mrf.mxu0
        %947 = vdwg.mxu0
        %v948 = vrcp.pop %v943
        %950 = vset.pattern.permute.xlu0 0
        %951 = vperm.xlu0 %950, %v948
        %v952 = vpop.permute.xlu0 %951
        %v954 = vmul.f32 %v903, %v952
        %956 = vrot.lane.b32.xlu0 %v720, 32
        %v957 = vpop.permute.xlu0 %956
        %960 = vrot.lane.b32.xlu0 %v837, 64
        %v961 = vpop.permute.xlu0 %960
        %964 = vrot.lane.b32.xlu0 %v954, 96
        %v965 = vpop.permute.xlu0 %964
        %vm967 = vcmask 261120
        %v968 = vsel %vm967, %v602, %v957
        %vm969 = vcmask 523264
        %v970 = vsel %vm969, %v968, %v961
        %vm971 = vcmask 785408
        %v972 = vsel %vm971, %v970, %v965
        %v973 = vld [vmem:[%s6] sm:$0x1]
        %v975 = vlaneseq
        %v976 = vshrl.u32 %v975, 7
        %v977 = vsub.s32 0, %v976
        %v978 = vrot.slane %v973, %v977
        %v980 = vadd.f32 %v972, %v978
        %vm981 = vcmp.gt.f32.partialorder %v980, 0.0
        %v982 = vmul.f32 %v980, 0.01
        %v983 = vsel %vm981, %v980, %v982
        %v984 = vpack.c.bf16 %v983, %v983
        %985 = vst [vmem:[%s323] sm:$0xf] %v984
        %s986 = sand.u32 %s209, 1
        %s987 = scalar_lea.sflag [#allocation3], %s986
        %s988 = sand.u32 %s209, 1
        %s989 = smul.addr %s988, 4
        %s990 = scalar_lea.vmem [#allocation5], %s989
        // Predicated region
        $region57: #{tpu_custom_call.1} parent=51 // pred_check
          %p991 = pneg %p219
        $region58: #{tpu_custom_call.1} parent=51 // pred_check_branch
          %993 = sbr.rel (%p991) target = $region60
        $region59: #{tpu_custom_call.1} parent=51 // pred_region
          %s995 = ssub.s32 64, 64
          %996 = vsyncadd %s987, %s995
          %s997 = smul.addr %s23, 64
          %s998 = scalar_lea.hbm %s8, %s997
          %s1000 = sshll.u32 %s990, 4
          %s1001 = int_to_ptr.vmem [resolvable:$true] %s1000
          %1003 = dma.vmem_to_hbm [thread:$0]  %s1001, 64, %s998, %s987
        $region60: #{tpu_custom_call.1} parent=51 // pred_fallthru
          _
      $region52: #{tpu_custom_call.1} parent=5 // pred_fallthru
        _
      %p1004 = scmp.le.s32.totalorder 2, %s18
      // Predicated region
      $region61: #{tpu_custom_call.1} parent=5 // pred_check
        %p1005 = pneg %p1004
      $region62: #{tpu_custom_call.1} parent=5 // pred_check_branch
        %1007 = sbr.rel (%p1005) target = $region64
      $region63: #{tpu_custom_call.1} parent=5 // pred_region
        %s1008 = ssub.s32 %s18, 2
        // Predicated region
        $region65: #{tpu_custom_call.1} parent=63 // pred_check
          %p1009 = pneg %p225
        $region66: #{tpu_custom_call.1} parent=63 // pred_check_branch
          %1011 = sbr.rel (%p1009) target = $region68
        $region67: #{tpu_custom_call.1} parent=63 // pred_region
          %s1012 = sand.u32 %s210, 1
          %s1013 = scalar_lea.sflag [#allocation3], %s1012
          %s1014 = sand.u32 %s210, 1
          %s1015 = smul.addr %s1014, 4
          %s1016 = scalar_lea.vmem [#allocation5], %s1015
          %1017 = dma.done %s1013, 64
        $region68: #{tpu_custom_call.1} parent=63 // pred_fallthru
          _
      $region64: #{tpu_custom_call.1} parent=5 // pred_fallthru
        _
    $region6: #{tpu_custom_call.1} parent=1 // loop_footer
      %s22 = sadd.s32 1, %s18
    $region7: #{tpu_custom_call.1} parent=1 // loop_footer_branch
      %17 = sbr.rel target = $region3
    $region8: #{tpu_custom_call.1} parent=1 // loop_exit
      _
    %1018 = vsyncpa [#allocation3], 1
    %s1019 = scalar_lea.sflag [#allocation3], 1
    %1020 = vsyncpa %s1019, 1
    %1021 = vsyncpa [#allocation4], 1
    %s1022 = scalar_lea.sflag [#allocation4], 1
    %1023 = vsyncpa %s1022, 1

</llo_original>
